<compile_context>
chip_gen: v7x
topology: tpu7x:2x2x1
jax: 0.10.0
libtpu: 0.0.40
codegen_flags: <defaults>
</compile_context>

<pallas_src>
import functools

import jax
import jax.numpy as jnp
from jax.experimental import pallas as pl
from jax.experimental.pallas import tpu as pltpu


_LANES = 128
_NUM_CLASSES = 10
_X_TILE_BUDGET = 8 * 1024 * 1024      # bytes per x block (Pallas double-buffers)
_VMEM_LIMIT = 48 * 1024 * 1024        # safe on v5e/v6e (128 MiB) and v7x (64 MiB)


def _round_up(x, m):
    return ((x + m - 1) // m) * m


def _cdiv(a, b):
    return -(-a // b)


def _classifier_kernel(x_ref, w_ref, b_ref, o_ref, *, inv_hw, tc, gc):
    # x_ref: (tb, tc, HW)   current batch/channel tile of the input
    # w_ref: (C, 128)       full weight, VMEM-resident (constant index_map)
    # b_ref: (1, 128) f32   bias, VMEM-resident
    # o_ref: (tb, 128) f32  output block == accumulator (resident across k)
    k = pl.program_id(1)

    @pl.when(k == 0)
    def _():
        o_ref[...] = jnp.zeros_like(o_ref)

    # Average pool over H*W: lane reduction in f32, then the 1/(H*W) scale.
    pooled = jnp.sum(x_ref[...].astype(jnp.float32), axis=-1) * inv_hw

    if gc == 1:
        w = w_ref[...]
    else:
        off = pl.multiple_of(k * tc, tc)
        w = w_ref[pl.ds(off, tc), :]

    o_ref[...] += jnp.dot(pooled.astype(w.dtype), w,
                          preferred_element_type=jnp.float32)

    @pl.when(k == pl.num_programs(1) - 1)
    def _():
        o_ref[...] += b_ref[...]


def prepare_classifier_params(weight, bias, dtype=jnp.float32):
    """One-time prep (hoisted out of the forward pass).

    weight: (10, C), bias: (10,) -> w_prep: (C, 128) in `dtype`, b_prep: (1, 128) f32.
    """
    n_cls = weight.shape[0]
    w_prep = jnp.pad(weight.T.astype(dtype), ((0, 0), (0, _LANES - n_cls)))
    b_prep = jnp.pad(bias.astype(jnp.float32), (0, _LANES - n_cls)).reshape(1, _LANES)
    return w_prep, b_prep


@functools.partial(jax.jit, static_argnames=("tb_target",))
def classifier_forward(x, w_prep, b_prep, *, tb_target=256):
    """x: (B, C, H, W) NCHW; w_prep: (C, 128); b_prep: (1, 128). Returns (B, 10)."""
    B, C, H, W = x.shape
    HW = H * W
    assert w_prep.shape == (C, _LANES)
    itemsize = jnp.dtype(x.dtype).itemsize

    x3 = x.reshape(B, C, HW)          # contiguous merge of minor dims -> free

    # --- batch tile: multiple of 8 (or the full B); >=2 tiles when B allows
    #     so both v7x TensorCores get a slice of the "parallel" axis.
    if B <= 8:
        tb = B
    else:
        tb = min(tb_target, _round_up(_cdiv(B, 2), 8))
    gb = _cdiv(B, tb)                 # partial last block: output store is masked

    # --- channel tile: exact divisor of C (no garbage in the contraction),
    #     multiple of 8, x block <= ~8 MiB.
    if C * tb * HW * itemsize <= _X_TILE_BUDGET:
        tc, gc = C, 1
    else:
        divisors = [d for d in range(8, C, 8)
                    if C % d == 0 and d * tb * HW * itemsize <= _X_TILE_BUDGET]
        if divisors:
            tc = max(divisors)
            gc = C // tc
        else:
            tc, gc = C, 1             # fallback: single channel block

    kernel = functools.partial(_classifier_kernel,
                               inv_hw=1.0 / float(HW), tc=tc, gc=gc)

    out = pl.pallas_call(
        kernel,
        out_shape=jax.ShapeDtypeStruct((B, _LANES), jnp.float32),
        grid_spec=pltpu.PrefetchScalarGridSpec(
            num_scalar_prefetch=0,
            grid=(gb, gc),
            in_specs=[
                pl.BlockSpec((tb, tc, HW), lambda i, k: (i, k, 0)),
                pl.BlockSpec((C, _LANES), lambda i, k: (0, 0)),   # resident
                pl.BlockSpec((1, _LANES), lambda i, k: (0, 0)),   # resident
            ],
            out_specs=pl.BlockSpec((tb, _LANES), lambda i, k: (i, 0)),
        ),
        compiler_params=pltpu.CompilerParams(
            dimension_semantics=("parallel", "arbitrary"),
            vmem_limit_bytes=_VMEM_LIMIT,
        ),
    )(x3, w_prep, b_prep)

    out = out[:, :_NUM_CLASSES]
    return out if x.dtype == jnp.float32 else out.astype(x.dtype)


if __name__ == "__main__":
    key = jax.random.PRNGKey(0)
    kx, kw, kb = jax.random.split(key, 3)

    B, C, H, W = 2, 4, 16, 16
    x = jax.random.normal(kx, (B, C, H, W), jnp.float32)

    # Mimics nn.Linear default init: U(-1/sqrt(C), 1/sqrt(C))
    bound = 1.0 / (C ** 0.5)
    weight = jax.random.uniform(kw, (_NUM_CLASSES, C), jnp.float32, -bound, bound)
    bias = jax.random.uniform(kb, (_NUM_CLASSES,), jnp.float32, -bound, bound)

    # Param prep happens once, outside the per-call forward.
    w_prep, b_prep = prepare_classifier_params(weight, bias, dtype=x.dtype)

    out = classifier_forward(x, w_prep, b_prep)
    out = jax.block_until_ready(out)

    # Plain-JAX reference (same semantics as the PyTorch module).
    ref = jnp.mean(x, axis=(2, 3)) @ weight.T + bias
    assert out.shape == (B, _NUM_CLASSES)
    assert jnp.allclose(out, ref, atol=1e-4, rtol=1e-4)

    print("KERNEL_OK")
</pallas_src>

<mosaic_0001>
module attributes {stable_mosaic.version = 11 : i64} {
  func.func @_classifier_kernel(%arg0: i32, %arg1: i32, %arg2: memref<2x4x256xf32, #tpu.memory_space<vmem>>, %arg3: memref<4x128xf32, #tpu.memory_space<vmem>>, %arg4: memref<1x128xf32, #tpu.memory_space<vmem>>, %arg5: memref<2x128xf32, #tpu.memory_space<vmem>>) attributes {dimension_semantics = [#tpu.dimension_semantics<parallel>, #tpu.dimension_semantics<arbitrary>], iteration_bounds = array<i64: 1, 1>, scalar_prefetch = 0 : i64, scratch_operands = 0 : i64, tpu.core_type = #tpu.core_type<tc>, window_params = [{transform_indices = @transform_0, window_bounds = array<i64: 2, 4, 256>}, {pipeline_mode = #tpu.pipeline_mode<synchronous>, transform_indices = @transform_1, window_bounds = array<i64: 4, 128>}, {pipeline_mode = #tpu.pipeline_mode<synchronous>, transform_indices = @transform_2, window_bounds = array<i64: 1, 128>}, {transform_indices = @transform_3, window_bounds = array<i64: 2, 128>}]} {
    %c0_i32 = arith.constant 0 : i32
    %0 = arith.cmpi eq, %arg1, %c0_i32 : i32
    %1 = arith.extui %0 : i1 to i32
    %c0_i32_0 = arith.constant 0 : i32
    %2 = arith.cmpi ne, %1, %c0_i32_0 : i32
    scf.if %2 {
      %cst_13 = arith.constant 0.000000e+00 : f32
      %15 = vector.broadcast %cst_13 : f32 to vector<2x128xf32>
      %c0_14 = arith.constant 0 : index
      %c0_15 = arith.constant 0 : index
      %16 = vector.load %arg5[%c0_14, %c0_15] : memref<2x128xf32, #tpu.memory_space<vmem>>, vector<2x128xf32>
      tpu.vector_store %arg5[%c0_14, %c0_15], %15 {strides = array<i32>} : memref<2x128xf32, #tpu.memory_space<vmem>>, vector<2x128xf32>,
    } else {
    }
    %c0 = arith.constant 0 : index
    %c0_1 = arith.constant 0 : index
    %c0_2 = arith.constant 0 : index
    %3 = vector.load %arg2[%c0, %c0_1, %c0_2] : memref<2x4x256xf32, #tpu.memory_space<vmem>>, vector<2x4x256xf32>
    %cst = arith.constant dense<0.000000e+00> : vector<2x4xf32>
    %4 = vector.multi_reduction <add>, %3, %cst [2] : vector<2x4x256xf32> to vector<2x4xf32>
    %cst_3 = arith.constant 3.906250e-03 : f32
    %5 = vector.broadcast %cst_3 : f32 to vector<2x4xf32>
    %6 = arith.mulf %4, %5 : vector<2x4xf32>
    %c0_4 = arith.constant 0 : index
    %c0_5 = arith.constant 0 : index
    %7 = vector.load %arg3[%c0_4, %c0_5] : memref<4x128xf32, #tpu.memory_space<vmem>>, vector<4x128xf32>
    %c0_6 = arith.constant 0 : index
    %c0_7 = arith.constant 0 : index
    %8 = vector.load %arg5[%c0_6, %c0_7] : memref<2x128xf32, #tpu.memory_space<vmem>>, vector<2x128xf32>
    %cst_8 = arith.constant dense<0.000000e+00> : vector<2x128xf32>
    %9 = tpu.matmul %6, %7, %cst_8 {dimension_numbers = #tpu.dot_dimension_numbers<[1], [0], [0], [1], [0, 0, 1, 1], [], []>} : vector<2x4xf32>, vector<4x128xf32>, vector<2x128xf32> -> vector<2x128xf32>
    %10 = arith.addf %8, %9 : vector<2x128xf32>
    %c0_9 = arith.constant 0 : index
    %c0_10 = arith.constant 0 : index
    %11 = vector.load %arg5[%c0_9, %c0_10] : memref<2x128xf32, #tpu.memory_space<vmem>>, vector<2x128xf32>
    tpu.vector_store %arg5[%c0_9, %c0_10], %10 {strides = array<i32>} : memref<2x128xf32, #tpu.memory_space<vmem>>, vector<2x128xf32>,
    %c0_i32_11 = arith.constant 0 : i32
    %12 = arith.cmpi eq, %arg1, %c0_i32_11 : i32
    %13 = arith.extui %12 : i1 to i32
    %c0_i32_12 = arith.constant 0 : i32
    %14 = arith.cmpi ne, %13, %c0_i32_12 : i32
    scf.if %14 {
      %c0_13 = arith.constant 0 : index
      %c0_14 = arith.constant 0 : index
      %15 = vector.load %arg5[%c0_13, %c0_14] : memref<2x128xf32, #tpu.memory_space<vmem>>, vector<2x128xf32>
      %c0_15 = arith.constant 0 : index
      %c0_16 = arith.constant 0 : index
      %16 = vector.load %arg4[%c0_15, %c0_16] : memref<1x128xf32, #tpu.memory_space<vmem>>, vector<1x128xf32>
      %17 = vector.broadcast %16 : vector<1x128xf32> to vector<2x128xf32>
      %18 = arith.addf %15, %17 : vector<2x128xf32>
      %c0_17 = arith.constant 0 : index
      %c0_18 = arith.constant 0 : index
      %19 = vector.load %arg5[%c0_17, %c0_18] : memref<2x128xf32, #tpu.memory_space<vmem>>, vector<2x128xf32>
      tpu.vector_store %arg5[%c0_17, %c0_18], %18 {strides = array<i32>} : memref<2x128xf32, #tpu.memory_space<vmem>>, vector<2x128xf32>,
    } else {
    }
    return
  }
  func.func @transform_0(%arg0: i32, %arg1: i32) -> (i32, i32, i32) {
    %c0_i32 = arith.constant 0 : i32
    %c0_i32_0 = arith.constant 0 : i32
    return %arg0, %arg1, %c0_i32 : i32, i32, i32
  }
  func.func @transform_1(%arg0: i32, %arg1: i32) -> (i32, i32) {
    %c0_i32 = arith.constant 0 : i32
    %c0_i32_0 = arith.constant 0 : i32
    %c0_i32_1 = arith.constant 0 : i32
    return %c0_i32, %c0_i32_0 : i32, i32
  }
  func.func @transform_2(%arg0: i32, %arg1: i32) -> (i32, i32) {
    %c0_i32 = arith.constant 0 : i32
    %c0_i32_0 = arith.constant 0 : i32
    %c0_i32_1 = arith.constant 0 : i32
    return %c0_i32, %c0_i32_0 : i32, i32
  }
  func.func @transform_3(%arg0: i32, %arg1: i32) -> (i32, i32) {
    %c0_i32 = arith.constant 0 : i32
    %c0_i32_0 = arith.constant 0 : i32
    return %arg0, %c0_i32 : i32, i32
  }
}

</mosaic_0001>

<llo_original>
// kernel: classifier_forward.1
$region0: #{classifier_forward.1}
  #allocation0 [shape = 'u32[]', space=smem, size = 0x4, offset = 0x4, fixed_abs, tag = 'smem constant byte address 0x4 - core index']
  #allocation1 [shape = 'u32[144,128]{1,0:T(1,128)}', space=vmem, size = 0x12000, scoped, tag = 'internal scratch']
  %s0 = inlined_call_operand.vmem [shape: f32[2,4,256], index: 0, kind: input, shape index: {}]
  %s1 = inlined_call_operand.vmem [shape: f32[4,128], index: 1, kind: input, shape index: {}]
  %s2 = inlined_call_operand.vmem [shape: f32[1,128], index: 2, kind: input, shape index: {}]
  %s3 = inlined_call_operand.hbm [shape: f32[2,128], index: 3, kind: output, shape index: {}]
  %s4 = sld [smem:[#allocation0]]
  $region30: #{classifier_forward.1} parent=0
    _
  %s6 = ssub.s32 1, %s4
  %s7 = scalar_select 0, %s6, %s4
  $region1: #{classifier_forward.1} parent=0
    #allocation2 [shape = 'u8[1024]{0}', space=vmem, size = 0x400, scoped, tag = 'output window, operand 0, single buffered']
    #allocation3 [shape = 's32[1]{0}', space=sflag, size = 0x4, scoped, tag = 'scoped memory for classifier_forward.1']
    %8 = vsyncpa [#allocation3], 0
    // Predicated region
    $region2: #{classifier_forward.1} parent=1 // pred_check
      _
    $region3: #{classifier_forward.1} parent=1 // pred_check_branch
      %10 = sbr.rel (0) target = $region5
    $region4: #{classifier_forward.1} parent=1 // pred_region
      _
    $region5: #{classifier_forward.1} parent=1 // pred_fallthru
      _
    // Predicated region
    $region6: #{classifier_forward.1} parent=1 // pred_check
      _
    $region7: #{classifier_forward.1} parent=1 // pred_check_branch
      %12 = sbr.rel (0) target = $region9
    $region8: #{classifier_forward.1} parent=1 // pred_region
      _
    $region9: #{classifier_forward.1} parent=1 // pred_fallthru
      _
    // Predicated region
    $region10: #{classifier_forward.1} parent=1 // pred_check
      _
    $region11: #{classifier_forward.1} parent=1 // pred_check_branch
      %14 = sbr.rel (0) target = $region13
    $region12: #{classifier_forward.1} parent=1 // pred_region
      _
    $region13: #{classifier_forward.1} parent=1 // pred_fallthru
      _
    %p15 = scmp.eq.s32.totalorder 0, 0
    // Predicated region
    $region14: #{classifier_forward.1} parent=1 // pred_check
      %p16 = pneg %p15
    $region15: #{classifier_forward.1} parent=1 // pred_check_branch
      %18 = sbr.rel (%p16) target = $region17
    $region16: #{classifier_forward.1} parent=1 // pred_region
      %19 = vst [vmem:[#allocation2] sm:$0x3] 0.0
    $region17: #{classifier_forward.1} parent=1 // pred_fallthru
      _
    %v20 = vld [vmem:[%s0] sm:$0xff]
    %v21 = vld [vmem:[%s0 + $0x8] sm:$0xff]
    %v24 = vcombine.high %v20, %v20
    %v25 = vcombine.high %v21, %v21
    %vm28 = vcmask 1043456
    %v29 = vsel %vm28, %v20, 0.0
    %v30 = vsel %vm28, %v24, 0.0
    %v31 = vadd.f32 %v29, %v30
    %32 = vadd.xlane.f32.xlu0 %v31
    %v33 = vpop.xlane.xlu0 %32
    %v34 = vsel %vm28, %v21, 0.0
    %v35 = vsel %vm28, %v25, 0.0
    %v36 = vadd.f32 %v34, %v35
    %37 = vadd.xlane.f32.xlu0 %v36
    %v38 = vpop.xlane.xlu0 %37
    %v39 = vmul.f32 %v33, 0.00390625
    %v40 = vmul.f32 %v38, 0.00390625
    %v41 = vld [vmem:[%s1] sm:$0xf]
    %v42 = vld [vmem:[#allocation2] sm:$0x3]
    %v45 = vlaneseq
    %v46 = vand.u32 %v45, 127
    %v47 = vlaneseq
    %v48 = vshrl.u32 %v47, 7
    %v49 = vsub.s32 %v46, %v48
    %v50 = vrot.slane %v39, %v49
    %v51 = vlaneseq
    %v52 = vshrl.u32 %v51, 7
    %v53 = vsub.s32 %v46, %v52
    %v54 = vrot.slane %v40, %v53
    %vm55 = vcmask 1041409
    %v56 = vsel %vm55, %v54, %v50
    %vm57 = vcmask 31744
    %v58 = vsel %vm57, %v56, 0
    %v61 = vsel %vm28, %v41, 0
    %63 = vmatprep.subr.mxu0 0.0
    %64 = vmatpush1.msra.mxu0 %v61
    %65 = vmatprep.subr.mxu0 0.0
    %66 = vmatpush1.msra.mxu0 0.0
    %67 = vmatprep.subr.mxu0 0.0
    %68 = vmatpush1.msra.mxu0 0.0
    %69 = vmatprep.subr.mxu0 0.0
    %70 = vmatpush1.msra.mxu0 0.0
    %71 = vmatprep.subr.mxu0 0.0
    %72 = vmatpush1.msra.mxu0 0.0
    %73 = vmatprep.subr.mxu0 0.0
    %74 = vmatpush1.msra.mxu0 0.0
    %75 = vmatprep.subr.mxu0 0.0
    %76 = vmatpush1.msra.mxu0 0.0
    %77 = vmatprep.subr.mxu0 0.0
    %78 = vmatpush1.msra.mxu0 0.0
    %79 = vmatprep.subr.mxu0 0.0
    %80 = vmatpush1.msra.mxu0 0.0
    %81 = vmatprep.subr.mxu0 0.0
    %82 = vmatpush1.msra.mxu0 0.0
    %83 = vmatprep.subr.mxu0 0.0
    %84 = vmatpush1.msra.mxu0 0.0
    %85 = vmatprep.subr.mxu0 0.0
    %86 = vmatpush1.msra.mxu0 0.0
    %87 = vmatprep.subr.mxu0 0.0
    %88 = vmatpush1.msra.mxu0 0.0
    %89 = vmatprep.subr.mxu0 0.0
    %90 = vmatpush1.msra.mxu0 0.0
    %91 = vmatprep.subr.mxu0 0.0
    %92 = vmatpush1.msra.mxu0 0.0
    %93 = vmatprep.subr.mxu0 0.0
    %94 = vmatpush1.msra.mxu0 0.0
    %95 = vmatprep.subr.mxu0 0.0
    %96 = vmatpush1.msra.mxu0 0.0
    %97 = vmatprep.subr.mxu0 0.0
    %98 = vmatpush1.msra.mxu0 0.0
    %99 = vmatprep.subr.mxu0 0.0
    %100 = vmatpush1.msra.mxu0 0.0
    %101 = vmatprep.subr.mxu0 0.0
    %102 = vmatpush1.msra.mxu0 0.0
    %103 = vmatprep.subr.mxu0 0.0
    %104 = vmatpush1.msra.mxu0 0.0
    %105 = vmatprep.subr.mxu0 0.0
    %106 = vmatpush1.msra.mxu0 0.0
    %107 = vmatprep.subr.mxu0 0.0
    %108 = vmatpush1.msra.mxu0 0.0
    %109 = vmatprep.subr.mxu0 0.0
    %110 = vmatpush1.msra.mxu0 0.0
    %111 = vmatprep.subr.mxu0 0.0
    %112 = vmatpush1.msra.mxu0 0.0
    %113 = vmatprep.subr.mxu0 0.0
    %114 = vmatpush1.msra.mxu0 0.0
    %115 = vmatprep.subr.mxu0 0.0
    %116 = vmatpush1.msra.mxu0 0.0
    %117 = vmatprep.subr.mxu0 0.0
    %118 = vmatpush1.msra.mxu0 0.0
    %119 = vmatprep.subr.mxu0 0.0
    %120 = vmatpush1.msra.mxu0 0.0
    %121 = vmatprep.subr.mxu0 0.0
    %122 = vmatpush1.msra.mxu0 0.0
    %123 = vmatprep.subr.mxu0 0.0
    %124 = vmatpush1.msra.mxu0 0.0
    %125 = vmatprep.subr.mxu0 0.0
    %126 = vmatpush1.msra.mxu0 0.0
    %127 = vmatprep.mubr.f32.mxu0 0.0
    %128 = vmatmul.mubr.f32.gmra.mrb[0].mxu0 %v58
    %v129 = vpop.f32.mrb[0].mxu0
    %v130 = vadd.f32 0.0, %v129
    %v131 = vpop.f32.mrb[0].mxu0
    %132 = vdwg.mxu0
    %v133 = vadd.f32 %v42, %v130
    %134 = vst [vmem:[#allocation2] sm:$0x3] %v133
    // Predicated region
    $region18: #{classifier_forward.1} parent=1 // pred_check
      %p135 = pneg %p15
    $region19: #{classifier_forward.1} parent=1 // pred_check_branch
      %137 = sbr.rel (%p135) target = $region21
    $region20: #{classifier_forward.1} parent=1 // pred_region
      %v138 = vld [vmem:[#allocation2] sm:$0x3]
      %v139 = vld [vmem:[%s2] sm:$0x1]
      %v141 = vlaneseq
      %v142 = vshrl.u32 %v141, 7
      %v143 = vsub.s32 0, %v142
      %v144 = vrot.slane %v139, %v143
      %v146 = vadd.f32 %v138, %v144
      %147 = vst [vmem:[#allocation2] sm:$0x3] %v146
    $region21: #{classifier_forward.1} parent=1 // pred_fallthru
      _
    // Predicated region
    $region22: #{classifier_forward.1} parent=1 // pred_check
      _
    $region23: #{classifier_forward.1} parent=1 // pred_check_branch
      %149 = sbr.rel (0) target = $region25
    $region24: #{classifier_forward.1} parent=1 // pred_region
      %s151 = ssub.s32 32, 32
      %152 = vsyncadd [#allocation3], %s151
      %s154 = sshll.u32 [#allocation2], 4
      %s155 = int_to_ptr.vmem [resolvable:$true] %s154
      %157 = dma.vmem_to_hbm [thread:$0]  %s155, 32, %s3, [#allocation3]
    $region25: #{classifier_forward.1} parent=1 // pred_fallthru
      _
    // Predicated region
    $region26: #{classifier_forward.1} parent=1 // pred_check
      _
    $region27: #{classifier_forward.1} parent=1 // pred_check_branch
      %159 = sbr.rel (0) target = $region29
    $region28: #{classifier_forward.1} parent=1 // pred_region
      %160 = dma.done [#allocation3], 32
    $region29: #{classifier_forward.1} parent=1 // pred_fallthru
      _
    %161 = vsyncpa [#allocation3], 1

</llo_original>
